<compile_context>
chip_gen: v7x
topology: tpu7x:2x2x1
jax: 0.10.0
libtpu: 0.0.40
codegen_flags: <defaults>
</compile_context>

<pallas_src>
import numpy as np
import jax
import jax.numpy as jnp
from jax.experimental import pallas as pl
from jax.experimental.pallas import tpu as pltpu

NUM_SCAN_SAMPLES = 34            # laser scan samples
OTHER = 4                        # goal-dist, goal-angle, prev-action features
STATE_DIM = NUM_SCAN_SAMPLES + OTHER      # 38
PAD_STATE = 128                  # lane-aligned padded state width
CONV_C = 8                       # conv_function: Conv1d(1, 8, kernel=4, stride=2)
CONV_K = 4
CONV_STRIDE = 2
CONV_LOUT = (NUM_SCAN_SAMPLES - CONV_K) // CONV_STRIDE + 1   # 16
CONV_OUT = CONV_C * CONV_LOUT                                # 128 == l1 in_features
HIDDEN = 128
FUSED_HIDDEN = 2 * HIDDEN        # 256: [l1 | l5]
NUM_HEADS = 2                    # x1, x2


def critic_kernel(states_ref, wconv_ref, bconv_ref, w15_ref, b15_ref,
                  whead_ref, wother_ref, bhead_ref, out_ref):
    s_bf = states_ref[...]                                   # (TB, 128) bf16, zero-padded states

    # conv_function(laser): Conv1d + ReLU + flatten, realized as one MXU matmul.
    conv = jnp.maximum(
        jnp.dot(s_bf, wconv_ref[...], preferred_element_type=jnp.float32)
        + bconv_ref[...], 0.0)                               # (TB, 128) f32

    # fused hidden layer: relu([l1(conv) | l3(conv)]) in a single N=256 matmul.
    h = jnp.maximum(
        jnp.dot(conv.astype(jnp.bfloat16), w15_ref[...],
                preferred_element_type=jnp.float32)
        + b15_ref[...], 0.0)                                 # (TB, 256) f32

    # fused heads: block-diagonal (256,2) for the hidden halves + (128,2) picking up `other`
    # (rows 34..37 of the padded state), fused (1,2) bias, final ReLU.
    heads = jnp.maximum(
        jnp.dot(h.astype(jnp.bfloat16), whead_ref[...],
                preferred_element_type=jnp.float32)
        + jnp.dot(s_bf, wother_ref[...], preferred_element_type=jnp.float32)
        + bhead_ref[...], 0.0)                               # (TB, 2) f32

    out_ref[...] = heads


def xavier_uniform(key, fan_in, fan_out):
    # nn.init.xavier_uniform_ on a torch (out, in) weight; stored here as (in, out) for x @ W.
    bound = float(np.sqrt(6.0 / (fan_in + fan_out)))
    return jax.random.uniform(key, (fan_in, fan_out), jnp.float32, -bound, bound)


def make_params(key):
    ks = jax.random.split(key, 6)

    # --- conv_function parameters (Conv1d(1, CONV_C, CONV_K, stride=CONV_STRIDE)) ---
    cbound = 1.0 / float(np.sqrt(1 * CONV_K))
    wc = np.asarray(jax.random.uniform(ks[0], (CONV_C, CONV_K), jnp.float32, -cbound, cbound))
    bc = np.asarray(jax.random.uniform(ks[1], (CONV_C,), jnp.float32, -cbound, cbound))
    # Unroll into a (PAD_STATE, CONV_OUT) matmul weight; rows >= NUM_SCAN_SAMPLES stay zero so the
    # padded state columns are inert.  Column order is channel-major (c*L_out + t) to match torch
    # Conv1d output flattened from (B, C, L_out).
    wconv = np.zeros((PAD_STATE, CONV_OUT), np.float32)
    bconv = np.zeros((1, CONV_OUT), np.float32)
    for c in range(CONV_C):
        for t in range(CONV_LOUT):
            col = c * CONV_LOUT + t
            wconv[t * CONV_STRIDE: t * CONV_STRIDE + CONV_K, col] = wc[c]
            bconv[0, col] = bc[c]

    # --- l1 and l5 (used for the `l3` call): fused (128, 256) weight, bias = 0.01 ---
    w1 = xavier_uniform(ks[2], HIDDEN, HIDDEN)
    w5 = xavier_uniform(ks[3], HIDDEN, HIDDEN)
    w15 = jnp.concatenate([w1, w5], axis=1)                  # (128, 256)
    b15 = jnp.full((1, FUSED_HIDDEN), 0.01, jnp.float32)

    # --- l2 / l4: Linear(132 -> 1) each, fused into block-diag head weights + `other` weights ---
    w2 = np.asarray(xavier_uniform(ks[4], HIDDEN + OTHER, 1))
    w4 = np.asarray(xavier_uniform(ks[5], HIDDEN + OTHER, 1))
    whead = np.zeros((FUSED_HIDDEN, NUM_HEADS), np.float32)  # [w2a; 0 | 0; w4a]
    whead[:HIDDEN, 0] = w2[:HIDDEN, 0]
    whead[HIDDEN:, 1] = w4[:HIDDEN, 0]
    wother = np.zeros((PAD_STATE, NUM_HEADS), np.float32)    # rows 34..37 hold [w2b | w4b]
    wother[NUM_SCAN_SAMPLES:STATE_DIM, 0] = w2[HIDDEN:, 0]
    wother[NUM_SCAN_SAMPLES:STATE_DIM, 1] = w4[HIDDEN:, 0]
    bhead = np.full((1, NUM_HEADS), 0.01, np.float32)        # fused b2 | b4

    # Matmul operands stored in bf16; biases stay f32 (added to f32 accumulators in-kernel).
    return (jnp.asarray(wconv, jnp.bfloat16), jnp.asarray(bconv, jnp.float32),
            w15.astype(jnp.bfloat16), b15,
            jnp.asarray(whead, jnp.bfloat16), jnp.asarray(wother, jnp.bfloat16),
            jnp.asarray(bhead, jnp.float32))


def _round_up(x, m):
    return ((x + m - 1) // m) * m


def critic_forward(states, actions, params, *, max_tile_b=512):
    # NOTE: `actions` is accepted but unused, exactly like the archive Critic.forward.
    del actions
    B, F = states.shape

    # Batch tile: multiple of 16 (bf16 sublane packing), capped at 512 rows.
    tile_b = min(max_tile_b, _round_up(B, 16))
    b_pad = _round_up(B, tile_b)

    # Pad to (b_pad, 128) lane-aligned width, cast to bf16 once; padding rows/cols are inert
    # because the corresponding weight rows are zero.
    s = jnp.zeros((b_pad, PAD_STATE), jnp.float32).at[:B, :F].set(states).astype(jnp.bfloat16)

    grid = (b_pad // tile_b,)
    # Weights/biases: full-array blocks with constant index_map -> resident in VMEM across steps.
    weight_specs = [pl.BlockSpec(p.shape, lambda i: (0, 0)) for p in params]

    flops = 2 * b_pad * (PAD_STATE * CONV_OUT + CONV_OUT * FUSED_HIDDEN
                         + FUSED_HIDDEN * NUM_HEADS + PAD_STATE * NUM_HEADS)
    bytes_accessed = int(s.size * s.dtype.itemsize
                         + sum(int(p.size) * p.dtype.itemsize for p in params)
                         + b_pad * NUM_HEADS * 4)

    out = pl.pallas_call(
        critic_kernel,
        out_shape=jax.ShapeDtypeStruct((b_pad, NUM_HEADS), jnp.float32),
        grid=grid,
        in_specs=[pl.BlockSpec((tile_b, PAD_STATE), lambda i: (i, 0))] + weight_specs,
        out_specs=pl.BlockSpec((tile_b, NUM_HEADS), lambda i: (i, 0)),
        compiler_params=pltpu.CompilerParams(dimension_semantics=("parallel",)),
        cost_estimate=pl.CostEstimate(flops=flops, transcendentals=0,
                                      bytes_accessed=bytes_accessed),
    )(s, *params)

    x1 = out[:B, 0:1]
    x2 = out[:B, 1:2]
    return x1, x2


if __name__ == "__main__":
    key = jax.random.PRNGKey(0)
    k_s, k_a, k_p = jax.random.split(key, 3)

    B = 2
    action_size = 2
    states = jax.random.uniform(k_s, (B, STATE_DIM), jnp.float32)
    actions = jax.random.uniform(k_a, (B, action_size), jnp.float32, -1.0, 1.0)
    params = make_params(k_p)

    x1, x2 = critic_forward(states, actions, params)
    jax.block_until_ready((x1, x2))

    # Pure-JAX reference mirroring the kernel math (same bf16 casts, f32 accumulation).
    (wconv, bconv, w15, b15, whead, wother, bhead) = params
    s_ref = jnp.zeros((B, PAD_STATE), jnp.float32).at[:, :STATE_DIM].set(states)
    s_ref = s_ref.astype(jnp.bfloat16)
    conv_ref = jnp.maximum(
        jnp.dot(s_ref, wconv, preferred_element_type=jnp.float32) + bconv, 0.0)
    h_ref = jnp.maximum(
        jnp.dot(conv_ref.astype(jnp.bfloat16), w15, preferred_element_type=jnp.float32)
        + b15, 0.0)
    heads_ref = jnp.maximum(
        jnp.dot(h_ref.astype(jnp.bfloat16), whead, preferred_element_type=jnp.float32)
        + jnp.dot(s_ref, wother, preferred_element_type=jnp.float32)
        + bhead, 0.0)

    assert x1.shape == (B, 1) and x1.dtype == jnp.float32
    assert x2.shape == (B, 1) and x2.dtype == jnp.float32
    assert bool(jnp.all(x1 >= 0.0)) and bool(jnp.all(x2 >= 0.0))
    assert bool(jnp.allclose(jnp.concatenate([x1, x2], axis=1), heads_ref,
                             rtol=5e-2, atol=5e-2))
    print("KERNEL_OK")
</pallas_src>

<mosaic_0001>
module attributes {stable_mosaic.version = 11 : i64} {
  func.func @critic_kernel(%arg0: i32, %arg1: memref<16x128xbf16, #tpu.memory_space<vmem>>, %arg2: memref<128x128xbf16, #tpu.memory_space<vmem>>, %arg3: memref<1x128xf32, #tpu.memory_space<vmem>>, %arg4: memref<128x256xbf16, #tpu.memory_space<vmem>>, %arg5: memref<1x256xf32, #tpu.memory_space<vmem>>, %arg6: memref<256x2xbf16, #tpu.memory_space<vmem>>, %arg7: memref<128x2xbf16, #tpu.memory_space<vmem>>, %arg8: memref<1x2xf32, #tpu.memory_space<vmem>>, %arg9: memref<16x2xf32, #tpu.memory_space<vmem>>) attributes {dimension_semantics = [#tpu.dimension_semantics<parallel>], iteration_bounds = array<i64: 1>, scalar_prefetch = 0 : i64, scratch_operands = 0 : i64, tpu.core_type = #tpu.core_type<tc>, window_params = [{transform_indices = @transform_0, window_bounds = array<i64: 16, 128>}, {pipeline_mode = #tpu.pipeline_mode<synchronous>, transform_indices = @transform_1, window_bounds = array<i64: 128, 128>}, {pipeline_mode = #tpu.pipeline_mode<synchronous>, transform_indices = @transform_2, window_bounds = array<i64: 1, 128>}, {pipeline_mode = #tpu.pipeline_mode<synchronous>, transform_indices = @transform_3, window_bounds = array<i64: 128, 256>}, {pipeline_mode = #tpu.pipeline_mode<synchronous>, transform_indices = @transform_4, window_bounds = array<i64: 1, 256>}, {pipeline_mode = #tpu.pipeline_mode<synchronous>, transform_indices = @transform_5, window_bounds = array<i64: 256, 2>}, {pipeline_mode = #tpu.pipeline_mode<synchronous>, transform_indices = @transform_6, window_bounds = array<i64: 128, 2>}, {pipeline_mode = #tpu.pipeline_mode<synchronous>, transform_indices = @transform_7, window_bounds = array<i64: 1, 2>}, {transform_indices = @transform_8, window_bounds = array<i64: 16, 2>}]} {
    %c0 = arith.constant 0 : index
    %c0_0 = arith.constant 0 : index
    %0 = vector.load %arg1[%c0, %c0_0] : memref<16x128xbf16, #tpu.memory_space<vmem>>, vector<16x128xbf16>
    %c0_1 = arith.constant 0 : index
    %c0_2 = arith.constant 0 : index
    %1 = vector.load %arg2[%c0_1, %c0_2] : memref<128x128xbf16, #tpu.memory_space<vmem>>, vector<128x128xbf16>
    %cst = arith.constant dense<0.000000e+00> : vector<16x128xf32>
    %2 = tpu.matmul %0, %1, %cst {dimension_numbers = #tpu.dot_dimension_numbers<[1], [0], [0], [1], [0, 0, 1, 1], [], []>} : vector<16x128xbf16>, vector<128x128xbf16>, vector<16x128xf32> -> vector<16x128xf32>
    %c0_3 = arith.constant 0 : index
    %c0_4 = arith.constant 0 : index
    %3 = vector.load %arg3[%c0_3, %c0_4] : memref<1x128xf32, #tpu.memory_space<vmem>>, vector<1x128xf32>
    %4 = vector.broadcast %3 : vector<1x128xf32> to vector<16x128xf32>
    %5 = arith.addf %2, %4 : vector<16x128xf32>
    %cst_5 = arith.constant 0.000000e+00 : f32
    %6 = vector.broadcast %cst_5 : f32 to vector<16x128xf32>
    %7 = arith.maximumf %5, %6 : vector<16x128xf32>
    %8 = arith.truncf %7 : vector<16x128xf32> to vector<16x128xbf16>
    %c0_6 = arith.constant 0 : index
    %c0_7 = arith.constant 0 : index
    %9 = vector.load %arg4[%c0_6, %c0_7] : memref<128x256xbf16, #tpu.memory_space<vmem>>, vector<128x256xbf16>
    %cst_8 = arith.constant dense<0.000000e+00> : vector<16x256xf32>
    %10 = tpu.matmul %8, %9, %cst_8 {dimension_numbers = #tpu.dot_dimension_numbers<[1], [0], [0], [1], [0, 0, 1, 1], [], []>} : vector<16x128xbf16>, vector<128x256xbf16>, vector<16x256xf32> -> vector<16x256xf32>
    %c0_9 = arith.constant 0 : index
    %c0_10 = arith.constant 0 : index
    %11 = vector.load %arg5[%c0_9, %c0_10] : memref<1x256xf32, #tpu.memory_space<vmem>>, vector<1x256xf32>
    %12 = vector.broadcast %11 : vector<1x256xf32> to vector<16x256xf32>
    %13 = arith.addf %10, %12 : vector<16x256xf32>
    %cst_11 = arith.constant 0.000000e+00 : f32
    %14 = vector.broadcast %cst_11 : f32 to vector<16x256xf32>
    %15 = arith.maximumf %13, %14 : vector<16x256xf32>
    %16 = arith.truncf %15 : vector<16x256xf32> to vector<16x256xbf16>
    %c0_12 = arith.constant 0 : index
    %c0_13 = arith.constant 0 : index
    %17 = vector.load %arg6[%c0_12, %c0_13] : memref<256x2xbf16, #tpu.memory_space<vmem>>, vector<256x2xbf16>
    %cst_14 = arith.constant dense<0.000000e+00> : vector<16x2xf32>
    %18 = tpu.matmul %16, %17, %cst_14 {dimension_numbers = #tpu.dot_dimension_numbers<[1], [0], [0], [1], [0, 0, 1, 1], [], []>} : vector<16x256xbf16>, vector<256x2xbf16>, vector<16x2xf32> -> vector<16x2xf32>
    %c0_15 = arith.constant 0 : index
    %c0_16 = arith.constant 0 : index
    %19 = vector.load %arg7[%c0_15, %c0_16] : memref<128x2xbf16, #tpu.memory_space<vmem>>, vector<128x2xbf16>
    %cst_17 = arith.constant dense<0.000000e+00> : vector<16x2xf32>
    %20 = tpu.matmul %0, %19, %cst_17 {dimension_numbers = #tpu.dot_dimension_numbers<[1], [0], [0], [1], [0, 0, 1, 1], [], []>} : vector<16x128xbf16>, vector<128x2xbf16>, vector<16x2xf32> -> vector<16x2xf32>
    %21 = arith.addf %18, %20 : vector<16x2xf32>
    %c0_18 = arith.constant 0 : index
    %c0_19 = arith.constant 0 : index
    %22 = vector.load %arg8[%c0_18, %c0_19] : memref<1x2xf32, #tpu.memory_space<vmem>>, vector<1x2xf32>
    %23 = vector.broadcast %22 : vector<1x2xf32> to vector<16x2xf32>
    %24 = arith.addf %21, %23 : vector<16x2xf32>
    %cst_20 = arith.constant 0.000000e+00 : f32
    %25 = vector.broadcast %cst_20 : f32 to vector<16x2xf32>
    %26 = arith.maximumf %24, %25 : vector<16x2xf32>
    %c0_21 = arith.constant 0 : index
    %c0_22 = arith.constant 0 : index
    %27 = vector.load %arg9[%c0_21, %c0_22] : memref<16x2xf32, #tpu.memory_space<vmem>>, vector<16x2xf32>
    tpu.vector_store %arg9[%c0_21, %c0_22], %26 {strides = array<i32>} : memref<16x2xf32, #tpu.memory_space<vmem>>, vector<16x2xf32>,
    return
  }
  func.func @transform_0(%arg0: i32) -> (i32, i32) {
    %c0_i32 = arith.constant 0 : i32
    %c0_i32_0 = arith.constant 0 : i32
    return %arg0, %c0_i32 : i32, i32
  }
  func.func @transform_1(%arg0: i32) -> (i32, i32) {
    %c0_i32 = arith.constant 0 : i32
    %c0_i32_0 = arith.constant 0 : i32
    %c0_i32_1 = arith.constant 0 : i32
    return %c0_i32, %c0_i32_0 : i32, i32
  }
  func.func @transform_2(%arg0: i32) -> (i32, i32) {
    %c0_i32 = arith.constant 0 : i32
    %c0_i32_0 = arith.constant 0 : i32
    %c0_i32_1 = arith.constant 0 : i32
    return %c0_i32, %c0_i32_0 : i32, i32
  }
  func.func @transform_3(%arg0: i32) -> (i32, i32) {
    %c0_i32 = arith.constant 0 : i32
    %c0_i32_0 = arith.constant 0 : i32
    %c0_i32_1 = arith.constant 0 : i32
    return %c0_i32, %c0_i32_0 : i32, i32
  }
  func.func @transform_4(%arg0: i32) -> (i32, i32) {
    %c0_i32 = arith.constant 0 : i32
    %c0_i32_0 = arith.constant 0 : i32
    %c0_i32_1 = arith.constant 0 : i32
    return %c0_i32, %c0_i32_0 : i32, i32
  }
  func.func @transform_5(%arg0: i32) -> (i32, i32) {
    %c0_i32 = arith.constant 0 : i32
    %c0_i32_0 = arith.constant 0 : i32
    %c0_i32_1 = arith.constant 0 : i32
    return %c0_i32, %c0_i32_0 : i32, i32
  }
  func.func @transform_6(%arg0: i32) -> (i32, i32) {
    %c0_i32 = arith.constant 0 : i32
    %c0_i32_0 = arith.constant 0 : i32
    %c0_i32_1 = arith.constant 0 : i32
    return %c0_i32, %c0_i32_0 : i32, i32
  }
  func.func @transform_7(%arg0: i32) -> (i32, i32) {
    %c0_i32 = arith.constant 0 : i32
    %c0_i32_0 = arith.constant 0 : i32
    %c0_i32_1 = arith.constant 0 : i32
    return %c0_i32, %c0_i32_0 : i32, i32
  }
  func.func @transform_8(%arg0: i32) -> (i32, i32) {
    %c0_i32 = arith.constant 0 : i32
    %c0_i32_0 = arith.constant 0 : i32
    return %arg0, %c0_i32 : i32, i32
  }
}

</mosaic_0001>

<llo_original>
// kernel: tpu_custom_call.1
$region0: #{tpu_custom_call.1}
  #allocation0 [shape = 'u32[]', space=smem, size = 0x4, offset = 0x4, fixed_abs, tag = 'smem constant byte address 0x4 - core index']
  #allocation1 [shape = 'u32[144,128]{1,0:T(1,128)}', space=vmem, size = 0x12000, scoped, tag = 'internal scratch']
  %s0 = inlined_call_operand.vmem [shape: bf16[16,128], index: 0, kind: input, shape index: {}]
  %s1 = inlined_call_operand.vmem [shape: bf16[128,128], index: 1, kind: input, shape index: {}]
  %s2 = inlined_call_operand.vmem [shape: f32[1,128], index: 2, kind: input, shape index: {}]
  %s3 = inlined_call_operand.vmem [shape: bf16[128,256], index: 3, kind: input, shape index: {}]
  %s4 = inlined_call_operand.vmem [shape: f32[1,256], index: 4, kind: input, shape index: {}]
  %s5 = inlined_call_operand.vmem [shape: bf16[256,2], index: 5, kind: input, shape index: {}]
  %s6 = inlined_call_operand.vmem [shape: bf16[128,2], index: 6, kind: input, shape index: {}]
  %s7 = inlined_call_operand.vmem [shape: f32[1,2], index: 7, kind: input, shape index: {}]
  %s8 = inlined_call_operand.vmem [shape: f32[16,2], index: 8, kind: output, shape index: {}]
  %s9 = sld [smem:[#allocation0]]
  $region42: #{tpu_custom_call.1} parent=0
    _
  %s11 = ssub.s32 1, %s9
  %s12 = scalar_select 0, %s11, %s9
  // Predicated region
  $region2: #{tpu_custom_call.1} parent=0 // pred_check
    _
  $region3: #{tpu_custom_call.1} parent=0 // pred_check_branch
    %14 = sbr.rel (0) target = $region5
  $region4: #{tpu_custom_call.1} parent=0 // pred_region
    _
  $region5: #{tpu_custom_call.1} parent=0 // pred_fallthru
    _
  // Predicated region
  $region6: #{tpu_custom_call.1} parent=0 // pred_check
    _
  $region7: #{tpu_custom_call.1} parent=0 // pred_check_branch
    %16 = sbr.rel (0) target = $region9
  $region8: #{tpu_custom_call.1} parent=0 // pred_region
    _
  $region9: #{tpu_custom_call.1} parent=0 // pred_fallthru
    _
  // Predicated region
  $region10: #{tpu_custom_call.1} parent=0 // pred_check
    _
  $region11: #{tpu_custom_call.1} parent=0 // pred_check_branch
    %18 = sbr.rel (0) target = $region13
  $region12: #{tpu_custom_call.1} parent=0 // pred_region
    _
  $region13: #{tpu_custom_call.1} parent=0 // pred_fallthru
    _
  // Predicated region
  $region14: #{tpu_custom_call.1} parent=0 // pred_check
    _
  $region15: #{tpu_custom_call.1} parent=0 // pred_check_branch
    %20 = sbr.rel (0) target = $region17
  $region16: #{tpu_custom_call.1} parent=0 // pred_region
    _
  $region17: #{tpu_custom_call.1} parent=0 // pred_fallthru
    _
  // Predicated region
  $region18: #{tpu_custom_call.1} parent=0 // pred_check
    _
  $region19: #{tpu_custom_call.1} parent=0 // pred_check_branch
    %22 = sbr.rel (0) target = $region21
  $region20: #{tpu_custom_call.1} parent=0 // pred_region
    _
  $region21: #{tpu_custom_call.1} parent=0 // pred_fallthru
    _
  // Predicated region
  $region22: #{tpu_custom_call.1} parent=0 // pred_check
    _
  $region23: #{tpu_custom_call.1} parent=0 // pred_check_branch
    %24 = sbr.rel (0) target = $region25
  $region24: #{tpu_custom_call.1} parent=0 // pred_region
    _
  $region25: #{tpu_custom_call.1} parent=0 // pred_fallthru
    _
  // Predicated region
  $region26: #{tpu_custom_call.1} parent=0 // pred_check
    _
  $region27: #{tpu_custom_call.1} parent=0 // pred_check_branch
    %26 = sbr.rel (0) target = $region29
  $region28: #{tpu_custom_call.1} parent=0 // pred_region
    _
  $region29: #{tpu_custom_call.1} parent=0 // pred_fallthru
    _
  // Predicated region
  $region30: #{tpu_custom_call.1} parent=0 // pred_check
    _
  $region31: #{tpu_custom_call.1} parent=0 // pred_check_branch
    %28 = sbr.rel (0) target = $region33
  $region32: #{tpu_custom_call.1} parent=0 // pred_region
    _
  $region33: #{tpu_custom_call.1} parent=0 // pred_fallthru
    _
  %v30 = vld [vmem:[%s0] sm:$0xf]
  %v31 = vld [vmem:[%s0 + $0x4] sm:$0xf]
  %v32 = vld [vmem:[%s1] sm:$0xf]
  %v33 = vld [vmem:[%s1 + $0x4] sm:$0xf]
  %v34 = vld [vmem:[%s1 + $0x8] sm:$0xf]
  %v35 = vld [vmem:[%s1 + $0xc] sm:$0xf]
  %v36 = vld [vmem:[%s1 + $0x10] sm:$0xf]
  %v37 = vld [vmem:[%s1 + $0x14] sm:$0xf]
  %v38 = vld [vmem:[%s1 + $0x18] sm:$0xf]
  %v39 = vld [vmem:[%s1 + $0x1c] sm:$0xf]
  %v40 = vld [vmem:[%s1 + $0x20] sm:$0xf]
  %v41 = vld [vmem:[%s1 + $0x24] sm:$0xf]
  %v42 = vld [vmem:[%s1 + $0x28] sm:$0xf]
  %v43 = vld [vmem:[%s1 + $0x2c] sm:$0xf]
  %v44 = vld [vmem:[%s1 + $0x30] sm:$0xf]
  %v45 = vld [vmem:[%s1 + $0x34] sm:$0xf]
  %v46 = vld [vmem:[%s1 + $0x38] sm:$0xf]
  %v47 = vld [vmem:[%s1 + $0x3c] sm:$0xf]
  %v48 = vld [vmem:[%s2] sm:$0x1]
  %v50 = vlaneseq
  %v51 = vshrl.u32 %v50, 7
  %v52 = vsub.s32 0, %v51
  %v53 = vrot.slane %v48, %v52
  %v57 = vunpack.c.l.b16 %v30
  %v58 = vunpack.c.l.b16 %v31
  %v59 = vpack.c.b16 %v58, %v57
  %v77 = vunpack.c.l.b16 %v32
  %v78 = vunpack.c.l.b16 %v33
  %v79 = vunpack.c.l.b16 %v34
  %v80 = vunpack.c.l.b16 %v35
  %v81 = vunpack.c.l.b16 %v36
  %v82 = vunpack.c.l.b16 %v37
  %v83 = vunpack.c.l.b16 %v38
  %v84 = vunpack.c.l.b16 %v39
  %v85 = vunpack.c.l.b16 %v40
  %v86 = vunpack.c.l.b16 %v41
  %v87 = vunpack.c.l.b16 %v42
  %v88 = vunpack.c.l.b16 %v43
  %v89 = vunpack.c.l.b16 %v44
  %v90 = vunpack.c.l.b16 %v45
  %v91 = vunpack.c.l.b16 %v46
  %v92 = vunpack.c.l.b16 %v47
  %v93 = vpack.c.b16 %v78, %v77
  %v94 = vpack.c.b16 %v80, %v79
  %v95 = vpack.c.b16 %v82, %v81
  %v96 = vpack.c.b16 %v84, %v83
  %v97 = vpack.c.b16 %v86, %v85
  %v98 = vpack.c.b16 %v88, %v87
  %v99 = vpack.c.b16 %v90, %v89
  %v100 = vpack.c.b16 %v92, %v91
  %109 = vmatprep.subr.bf16.mxu0 0
  %110 = vmatpush1.bf16.msra.mxu0 %v93
  %111 = vmatprep.subr.bf16.mxu0 0
  %112 = vmatpush1.bf16.msra.mxu0 %v94
  %113 = vmatprep.subr.bf16.mxu0 0
  %114 = vmatpush1.bf16.msra.mxu0 %v95
  %115 = vmatprep.subr.bf16.mxu0 0
  %116 = vmatpush1.bf16.msra.mxu0 %v96
  %117 = vmatprep.subr.bf16.mxu0 0
  %118 = vmatpush1.bf16.msra.mxu0 %v97
  %119 = vmatprep.subr.bf16.mxu0 0
  %120 = vmatpush1.bf16.msra.mxu0 %v98
  %121 = vmatprep.subr.bf16.mxu0 0
  %122 = vmatpush1.bf16.msra.mxu0 %v99
  %123 = vmatprep.subr.bf16.mxu0 0
  %124 = vmatpush1.bf16.msra.mxu0 %v100
  %125 = vmatprep.subr.bf16.mxu0 0
  %126 = vmatpush1.bf16.msra.mxu0 0
  %127 = vmatprep.subr.bf16.mxu0 0
  %128 = vmatpush1.bf16.msra.mxu0 0
  %129 = vmatprep.subr.bf16.mxu0 0
  %130 = vmatpush1.bf16.msra.mxu0 0
  %131 = vmatprep.subr.bf16.mxu0 0
  %132 = vmatpush1.bf16.msra.mxu0 0
  %133 = vmatprep.subr.bf16.mxu0 0
  %134 = vmatpush1.bf16.msra.mxu0 0
  %135 = vmatprep.subr.bf16.mxu0 0
  %136 = vmatpush1.bf16.msra.mxu0 0
  %137 = vmatprep.subr.bf16.mxu0 0
  %138 = vmatpush1.bf16.msra.mxu0 0
  %139 = vmatprep.subr.bf16.mxu0 0
  %140 = vmatpush1.bf16.msra.mxu0 0
  %141 = vmatprep.mubr.bf16.mxu0 0
  %142 = vmatmul.mubr.bf16.gmra.mrb[0].mxu0 %v59
  %v143 = vpop.f32.mrb[0].mxu0
  %v144 = vadd.f32 %v53, %v143
  %v145 = vpop.f32.mrb[0].mxu0
  %v146 = vpop.f32.mrb[0].mxu0
  %v147 = vadd.f32 %v53, %v146
  %v148 = vpop.f32.mrb[0].mxu0
  %149 = vdwg.mxu0
  %v150 = vmax.f32 %v144, 0.0
  %v151 = vmax.f32 %v147, 0.0
  %v152 = vpack.c.bf16 %v151, %v150
  %v153 = vld [vmem:[%s3] sm:$0xff]
  %v154 = vld [vmem:[%s3 + $0x8] sm:$0xff]
  %v155 = vld [vmem:[%s3 + $0x10] sm:$0xff]
  %v156 = vld [vmem:[%s3 + $0x18] sm:$0xff]
  %v157 = vld [vmem:[%s3 + $0x20] sm:$0xff]
  %v158 = vld [vmem:[%s3 + $0x28] sm:$0xff]
  %v159 = vld [vmem:[%s3 + $0x30] sm:$0xff]
  %v160 = vld [vmem:[%s3 + $0x38] sm:$0xff]
  %v161 = vld [vmem:[%s3 + $0x40] sm:$0xff]
  %v162 = vld [vmem:[%s3 + $0x48] sm:$0xff]
  %v163 = vld [vmem:[%s3 + $0x50] sm:$0xff]
  %v164 = vld [vmem:[%s3 + $0x58] sm:$0xff]
  %v165 = vld [vmem:[%s3 + $0x60] sm:$0xff]
  %v166 = vld [vmem:[%s3 + $0x68] sm:$0xff]
  %v167 = vld [vmem:[%s3 + $0x70] sm:$0xff]
  %v168 = vld [vmem:[%s3 + $0x78] sm:$0xff]
  %v169 = vld [vmem:[%s4] sm:$0x3]
  %v171 = vlaneseq
  %v172 = vshrl.u32 %v171, 7
  %v173 = vsub.s32 0, %v172
  %v174 = vrot.slane %v169, %v173
  %v175 = vlaneseq
  %v176 = vshrl.u32 %v175, 7
  %v177 = vsub.s32 1, %v176
  %v178 = vrot.slane %v169, %v177
  %v197 = vunpack.c.l.b16 %v153
  %v198 = vunpack.c.h.b16 %v153
  %v199 = vunpack.c.l.b16 %v154
  %v200 = vunpack.c.h.b16 %v154
  %v201 = vunpack.c.l.b16 %v155
  %v202 = vunpack.c.h.b16 %v155
  %v203 = vunpack.c.l.b16 %v156
  %v204 = vunpack.c.h.b16 %v156
  %v205 = vunpack.c.l.b16 %v157
  %v206 = vunpack.c.h.b16 %v157
  %v207 = vunpack.c.l.b16 %v158
  %v208 = vunpack.c.h.b16 %v158
  %v209 = vunpack.c.l.b16 %v159
  %v210 = vunpack.c.h.b16 %v159
  %v211 = vunpack.c.l.b16 %v160
  %v212 = vunpack.c.h.b16 %v160
  %v213 = vunpack.c.l.b16 %v161
  %v214 = vunpack.c.h.b16 %v161
  %v215 = vunpack.c.l.b16 %v162
  %v216 = vunpack.c.h.b16 %v162
  %v217 = vunpack.c.l.b16 %v163
  %v218 = vunpack.c.h.b16 %v163
  %v219 = vunpack.c.l.b16 %v164
  %v220 = vunpack.c.h.b16 %v164
  %v221 = vunpack.c.l.b16 %v165
  %v222 = vunpack.c.h.b16 %v165
  %v223 = vunpack.c.l.b16 %v166
  %v224 = vunpack.c.h.b16 %v166
  %v225 = vunpack.c.l.b16 %v167
  %v226 = vunpack.c.h.b16 %v167
  %v227 = vunpack.c.l.b16 %v168
  %v228 = vunpack.c.h.b16 %v168
  %v229 = vpack.c.b16 %v199, %v197
  %v230 = vpack.c.b16 %v200, %v198
  %v231 = vpack.c.b16 %v203, %v201
  %v232 = vpack.c.b16 %v204, %v202
  %v233 = vpack.c.b16 %v207, %v205
  %v234 = vpack.c.b16 %v208, %v206
  %v235 = vpack.c.b16 %v211, %v209
  %v236 = vpack.c.b16 %v212, %v210
  %v237 = vpack.c.b16 %v215, %v213
  %v238 = vpack.c.b16 %v216, %v214
  %v239 = vpack.c.b16 %v219, %v217
  %v240 = vpack.c.b16 %v220, %v218
  %v241 = vpack.c.b16 %v223, %v221
  %v242 = vpack.c.b16 %v224, %v222
  %v243 = vpack.c.b16 %v227, %v225
  %v244 = vpack.c.b16 %v228, %v226
  %261 = vmatprep.subr.bf16.mxu0 %v230
  %262 = vmatpush1.bf16.msra.mxu0 %v229
  %263 = vmatprep.subr.bf16.mxu0 %v232
  %264 = vmatpush1.bf16.msra.mxu0 %v231
  %265 = vmatprep.subr.bf16.mxu0 %v234
  %266 = vmatpush1.bf16.msra.mxu0 %v233
  %267 = vmatprep.subr.bf16.mxu0 %v236
  %268 = vmatpush1.bf16.msra.mxu0 %v235
  %269 = vmatprep.subr.bf16.mxu0 %v238
  %270 = vmatpush1.bf16.msra.mxu0 %v237
  %271 = vmatprep.subr.bf16.mxu0 %v240
  %272 = vmatpush1.bf16.msra.mxu0 %v239
  %273 = vmatprep.subr.bf16.mxu0 %v242
  %274 = vmatpush1.bf16.msra.mxu0 %v241
  %275 = vmatprep.subr.bf16.mxu0 %v244
  %276 = vmatpush1.bf16.msra.mxu0 %v243
  %277 = vmatprep.subr.bf16.mxu0 0
  %278 = vmatpush1.bf16.msra.mxu0 0
  %279 = vmatprep.subr.bf16.mxu0 0
  %280 = vmatpush1.bf16.msra.mxu0 0
  %281 = vmatprep.subr.bf16.mxu0 0
  %282 = vmatpush1.bf16.msra.mxu0 0
  %283 = vmatprep.subr.bf16.mxu0 0
  %284 = vmatpush1.bf16.msra.mxu0 0
  %285 = vmatprep.subr.bf16.mxu0 0
  %286 = vmatpush1.bf16.msra.mxu0 0
  %287 = vmatprep.subr.bf16.mxu0 0
  %288 = vmatpush1.bf16.msra.mxu0 0
  %289 = vmatprep.subr.bf16.mxu0 0
  %290 = vmatpush1.bf16.msra.mxu0 0
  %291 = vmatprep.subr.bf16.mxu0 0
  %292 = vmatpush1.bf16.msra.mxu0 0
  %293 = vmatprep.mubr.bf16.mxu0 0
  %294 = vmatmul.mubr.bf16.gmra.mrb[0].mxu0 %v152
  %v295 = vpop.f32.mrb[0].mxu0
  %v296 = vadd.f32 %v174, %v295
  %v297 = vpop.f32.mrb[0].mxu0
  %v298 = vadd.f32 %v178, %v297
  %v299 = vpop.f32.mrb[0].mxu0
  %v300 = vadd.f32 %v174, %v299
  %v301 = vpop.f32.mrb[0].mxu0
  %v302 = vadd.f32 %v178, %v301
  %303 = vdwg.mxu0
  %v304 = vmax.f32 %v296, 0.0
  %v305 = vmax.f32 %v298, 0.0
  %v306 = vmax.f32 %v300, 0.0
  %v307 = vmax.f32 %v302, 0.0
  %v308 = vpack.c.bf16 %v306, %v304
  %v309 = vpack.c.bf16 %v307, %v305
  %v310 = vld [vmem:[%s5] sm:$0xf]
  %v311 = vld [vmem:[%s5 + $0x4] sm:$0xf]
  %v312 = vld [vmem:[%s5 + $0x8] sm:$0xf]
  %v313 = vld [vmem:[%s5 + $0xc] sm:$0xf]
  %v314 = vld [vmem:[%s5 + $0x10] sm:$0xf]
  %v315 = vld [vmem:[%s5 + $0x14] sm:$0xf]
  %v316 = vld [vmem:[%s5 + $0x18] sm:$0xf]
  %v317 = vld [vmem:[%s5 + $0x1c] sm:$0xf]
  %v318 = vld [vmem:[%s5 + $0x20] sm:$0xf]
  %v319 = vld [vmem:[%s5 + $0x24] sm:$0xf]
  %v320 = vld [vmem:[%s5 + $0x28] sm:$0xf]
  %v321 = vld [vmem:[%s5 + $0x2c] sm:$0xf]
  %v322 = vld [vmem:[%s5 + $0x30] sm:$0xf]
  %v323 = vld [vmem:[%s5 + $0x34] sm:$0xf]
  %v324 = vld [vmem:[%s5 + $0x38] sm:$0xf]
  %v325 = vld [vmem:[%s5 + $0x3c] sm:$0xf]
  %v326 = vld [vmem:[%s5 + $0x40] sm:$0xf]
  %v327 = vld [vmem:[%s5 + $0x44] sm:$0xf]
  %v328 = vld [vmem:[%s5 + $0x48] sm:$0xf]
  %v329 = vld [vmem:[%s5 + $0x4c] sm:$0xf]
  %v330 = vld [vmem:[%s5 + $0x50] sm:$0xf]
  %v331 = vld [vmem:[%s5 + $0x54] sm:$0xf]
  %v332 = vld [vmem:[%s5 + $0x58] sm:$0xf]
  %v333 = vld [vmem:[%s5 + $0x5c] sm:$0xf]
  %v334 = vld [vmem:[%s5 + $0x60] sm:$0xf]
  %v335 = vld [vmem:[%s5 + $0x64] sm:$0xf]
  %v336 = vld [vmem:[%s5 + $0x68] sm:$0xf]
  %v337 = vld [vmem:[%s5 + $0x6c] sm:$0xf]
  %v338 = vld [vmem:[%s5 + $0x70] sm:$0xf]
  %v339 = vld [vmem:[%s5 + $0x74] sm:$0xf]
  %v340 = vld [vmem:[%s5 + $0x78] sm:$0xf]
  %v341 = vld [vmem:[%s5 + $0x7c] sm:$0xf]
  %v342 = vld [vmem:[%s6] sm:$0xf]
  %v343 = vld [vmem:[%s6 + $0x4] sm:$0xf]
  %v344 = vld [vmem:[%s6 + $0x8] sm:$0xf]
  %v345 = vld [vmem:[%s6 + $0xc] sm:$0xf]
  %v346 = vld [vmem:[%s6 + $0x10] sm:$0xf]
  %v347 = vld [vmem:[%s6 + $0x14] sm:$0xf]
  %v348 = vld [vmem:[%s6 + $0x18] sm:$0xf]
  %v349 = vld [vmem:[%s6 + $0x1c] sm:$0xf]
  %v350 = vld [vmem:[%s6 + $0x20] sm:$0xf]
  %v351 = vld [vmem:[%s6 + $0x24] sm:$0xf]
  %v352 = vld [vmem:[%s6 + $0x28] sm:$0xf]
  %v353 = vld [vmem:[%s6 + $0x2c] sm:$0xf]
  %v354 = vld [vmem:[%s6 + $0x30] sm:$0xf]
  %v355 = vld [vmem:[%s6 + $0x34] sm:$0xf]
  %v356 = vld [vmem:[%s6 + $0x38] sm:$0xf]
  %v357 = vld [vmem:[%s6 + $0x3c] sm:$0xf]
  %v374 = vunpack.c.l.b16 %v342
  %v375 = vunpack.c.l.b16 %v343
  %v376 = vunpack.c.l.b16 %v344
  %v377 = vunpack.c.l.b16 %v345
  %v378 = vunpack.c.l.b16 %v346
  %v379 = vunpack.c.l.b16 %v347
  %v380 = vunpack.c.l.b16 %v348
  %v381 = vunpack.c.l.b16 %v349
  %v382 = vunpack.c.l.b16 %v350
  %v383 = vunpack.c.l.b16 %v351
  %v384 = vunpack.c.l.b16 %v352
  %v385 = vunpack.c.l.b16 %v353
  %v386 = vunpack.c.l.b16 %v354
  %v387 = vunpack.c.l.b16 %v355
  %v388 = vunpack.c.l.b16 %v356
  %v389 = vunpack.c.l.b16 %v357
  %v390 = vpack.c.b16 %v375, %v374
  %v391 = vpack.c.b16 %v377, %v376
  %v392 = vpack.c.b16 %v379, %v378
  %v393 = vpack.c.b16 %v381, %v380
  %v394 = vpack.c.b16 %v383, %v382
  %v395 = vpack.c.b16 %v385, %v384
  %v396 = vpack.c.b16 %v387, %v386
  %v397 = vpack.c.b16 %v389, %v388
  %406 = vmatprep.subr.bf16.mxu0 0
  %407 = vmatpush1.bf16.msra.mxu0 %v390
  %408 = vmatprep.subr.bf16.mxu0 0
  %409 = vmatpush1.bf16.msra.mxu0 %v391
  %410 = vmatprep.subr.bf16.mxu0 0
  %411 = vmatpush1.bf16.msra.mxu0 %v392
  %412 = vmatprep.subr.bf16.mxu0 0
  %413 = vmatpush1.bf16.msra.mxu0 %v393
  %414 = vmatprep.subr.bf16.mxu0 0
  %415 = vmatpush1.bf16.msra.mxu0 %v394
  %416 = vmatprep.subr.bf16.mxu0 0
  %417 = vmatpush1.bf16.msra.mxu0 %v395
  %418 = vmatprep.subr.bf16.mxu0 0
  %419 = vmatpush1.bf16.msra.mxu0 %v396
  %420 = vmatprep.subr.bf16.mxu0 0
  %421 = vmatpush1.bf16.msra.mxu0 %v397
  %422 = vmatprep.subr.bf16.mxu0 0
  %423 = vmatpush1.bf16.msra.mxu0 0
  %424 = vmatprep.subr.bf16.mxu0 0
  %425 = vmatpush1.bf16.msra.mxu0 0
  %426 = vmatprep.subr.bf16.mxu0 0
  %427 = vmatpush1.bf16.msra.mxu0 0
  %428 = vmatprep.subr.bf16.mxu0 0
  %429 = vmatpush1.bf16.msra.mxu0 0
  %430 = vmatprep.subr.bf16.mxu0 0
  %431 = vmatpush1.bf16.msra.mxu0 0
  %432 = vmatprep.subr.bf16.mxu0 0
  %433 = vmatpush1.bf16.msra.mxu0 0
  %434 = vmatprep.subr.bf16.mxu0 0
  %435 = vmatpush1.bf16.msra.mxu0 0
  %436 = vmatprep.subr.bf16.mxu0 0
  %437 = vmatpush1.bf16.msra.mxu0 0
  %438 = vmatprep.mubr.bf16.mxu0 0
  %439 = vmatmul.mubr.bf16.gmra.mrb[0].mxu0 %v59
  %v440 = vpop.f32.mrb[0].mxu0
  %v441 = vadd.f32 0.0, %v440
  %v442 = vpop.f32.mrb[0].mxu0
  %v443 = vpop.f32.mrb[0].mxu0
  %v444 = vadd.f32 0.0, %v443
  %v445 = vpop.f32.mrb[0].mxu0
  %446 = vdwg.mxu0
  %v479 = vunpack.c.l.b16 %v310
  %v480 = vunpack.c.l.b16 %v311
  %v481 = vunpack.c.l.b16 %v312
  %v482 = vunpack.c.l.b16 %v313
  %v483 = vunpack.c.l.b16 %v314
  %v484 = vunpack.c.l.b16 %v315
  %v485 = vunpack.c.l.b16 %v316
  %v486 = vunpack.c.l.b16 %v317
  %v487 = vunpack.c.l.b16 %v318
  %v488 = vunpack.c.l.b16 %v319
  %v489 = vunpack.c.l.b16 %v320
  %v490 = vunpack.c.l.b16 %v321
  %v491 = vunpack.c.l.b16 %v322
  %v492 = vunpack.c.l.b16 %v323
  %v493 = vunpack.c.l.b16 %v324
  %v494 = vunpack.c.l.b16 %v325
  %v495 = vunpack.c.l.b16 %v326
  %v496 = vunpack.c.l.b16 %v327
  %v497 = vunpack.c.l.b16 %v328
  %v498 = vunpack.c.l.b16 %v329
  %v499 = vunpack.c.l.b16 %v330
  %v500 = vunpack.c.l.b16 %v331
  %v501 = vunpack.c.l.b16 %v332
  %v502 = vunpack.c.l.b16 %v333
  %v503 = vunpack.c.l.b16 %v334
  %v504 = vunpack.c.l.b16 %v335
  %v505 = vunpack.c.l.b16 %v336
  %v506 = vunpack.c.l.b16 %v337
  %v507 = vunpack.c.l.b16 %v338
  %v508 = vunpack.c.l.b16 %v339
  %v509 = vunpack.c.l.b16 %v340
  %v510 = vunpack.c.l.b16 %v341
  %v511 = vpack.c.b16 %v480, %v479
  %v512 = vpack.c.b16 %v482, %v481
  %v513 = vpack.c.b16 %v484, %v483
  %v514 = vpack.c.b16 %v486, %v485
  %v515 = vpack.c.b16 %v488, %v487
  %v516 = vpack.c.b16 %v490, %v489
  %v517 = vpack.c.b16 %v492, %v491
  %v518 = vpack.c.b16 %v494, %v493
  %v519 = vpack.c.b16 %v496, %v495
  %v520 = vpack.c.b16 %v498, %v497
  %v521 = vpack.c.b16 %v500, %v499
  %v522 = vpack.c.b16 %v502, %v501
  %v523 = vpack.c.b16 %v504, %v503
  %v524 = vpack.c.b16 %v506, %v505
  %v525 = vpack.c.b16 %v508, %v507
  %v526 = vpack.c.b16 %v510, %v509
  %543 = vmatprep.subr.bf16.mxu0 0
  %544 = vmatpush1.bf16.msra.mxu0 %v511
  %545 = vmatprep.subr.bf16.mxu0 0
  %546 = vmatpush1.bf16.msra.mxu0 %v512
  %547 = vmatprep.subr.bf16.mxu0 0
  %548 = vmatpush1.bf16.msra.mxu0 %v513
  %549 = vmatprep.subr.bf16.mxu0 0
  %550 = vmatpush1.bf16.msra.mxu0 %v514
  %551 = vmatprep.subr.bf16.mxu0 0
  %552 = vmatpush1.bf16.msra.mxu0 %v515
  %553 = vmatprep.subr.bf16.mxu0 0
  %554 = vmatpush1.bf16.msra.mxu0 %v516
  %555 = vmatprep.subr.bf16.mxu0 0
  %556 = vmatpush1.bf16.msra.mxu0 %v517
  %557 = vmatprep.subr.bf16.mxu0 0
  %558 = vmatpush1.bf16.msra.mxu0 %v518
  %559 = vmatprep.subr.bf16.mxu0 0
  %560 = vmatpush1.bf16.msra.mxu0 %v519
  %561 = vmatprep.subr.bf16.mxu0 0
  %562 = vmatpush1.bf16.msra.mxu0 %v520
  %563 = vmatprep.subr.bf16.mxu0 0
  %564 = vmatpush1.bf16.msra.mxu0 %v521
  %565 = vmatprep.subr.bf16.mxu0 0
  %566 = vmatpush1.bf16.msra.mxu0 %v522
  %567 = vmatprep.subr.bf16.mxu0 0
  %568 = vmatpush1.bf16.msra.mxu0 %v523
  %569 = vmatprep.subr.bf16.mxu0 0
  %570 = vmatpush1.bf16.msra.mxu0 %v524
  %571 = vmatprep.subr.bf16.mxu0 0
  %572 = vmatpush1.bf16.msra.mxu0 %v525
  %573 = vmatprep.subr.bf16.mxu0 0
  %574 = vmatpush1.bf16.msra.mxu0 %v526
  %575 = vmatprep.mubr.bf16.mxu0 %v309
  %576 = vmatmul.mubr.bf16.gmra.mrb[0].mxu0 %v308
  %v577 = vpop.f32.mrb[0].mxu0
  %v578 = vadd.f32 %v441, %v577
  %v579 = vpop.f32.mrb[0].mxu0
  %v580 = vpop.f32.mrb[0].mxu0
  %v581 = vadd.f32 %v444, %v580
  %v582 = vpop.f32.mrb[0].mxu0
  %583 = vdwg.mxu0
  %v584 = vld [vmem:[%s7] sm:$0x1]
  %v586 = vlaneseq
  %v587 = vshrl.u32 %v586, 7
  %v588 = vsub.s32 0, %v587
  %v589 = vrot.slane %v584, %v588
  %v591 = vadd.f32 %v578, %v589
  %v592 = vadd.f32 %v581, %v589
  %v593 = vmax.f32 %v591, 0.0
  %v594 = vmax.f32 %v592, 0.0
  %vm595 = vcmask 15360
  %596 = vst.msk [vmem:[%s8] sm:$0xff] %vm595, %v593
  %597 = vst.msk [vmem:[%s8 + $0x8] sm:$0xff] %vm595, %v594
  // Predicated region
  $region34: #{tpu_custom_call.1} parent=0 // pred_check
    _
  $region35: #{tpu_custom_call.1} parent=0 // pred_check_branch
    %599 = sbr.rel (0) target = $region37
  $region36: #{tpu_custom_call.1} parent=0 // pred_region
    _
  $region37: #{tpu_custom_call.1} parent=0 // pred_fallthru
    _
  // Predicated region
  $region38: #{tpu_custom_call.1} parent=0 // pred_check
    _
  $region39: #{tpu_custom_call.1} parent=0 // pred_check_branch
    %601 = sbr.rel (0) target = $region41
  $region40: #{tpu_custom_call.1} parent=0 // pred_region
    _
  $region41: #{tpu_custom_call.1} parent=0 // pred_fallthru
    _

</llo_original>
